<compile_context>
chip_gen: v7x
topology: tpu7x:2x2x1
jax: 0.10.0
libtpu: 0.0.40
codegen_flags: <defaults>
</compile_context>

<pallas_src>
import functools

import jax
import jax.numpy as jnp
from jax.experimental import pallas as pl
from jax.experimental.pallas import tpu as pltpu


def _round_up(x, m):
    return ((x + m - 1) // m) * m


def _cdiv(a, b):
    return -(-a // b)


def _detect_vmem_limit_bytes():
    """~Half of physical VMEM: 64 MiB on v5e/v6e (128 MiB), 32 MiB on v7x."""
    try:
        cap = int(pltpu.get_tpu_info().vmem_capacity_bytes)
    except Exception:
        cap = 64 * 1024 * 1024
    return max(32 * 1024 * 1024, min(cap // 2, 96 * 1024 * 1024))


_VMEM_LIMIT_BYTES = _detect_vmem_limit_bytes()
_NUM_STATS_SHARDS = 2          # leading "parallel" axis of the stats pass (v7x dual TC)


# ---------------------------------------------------------------------------
# Shared in-kernel coefficient math: per-lane [sum; sumsq] -> (scale, shift).
# Pure VPU/XLU (mask fold + broadcast expand), no MXU, no int div by non-pow2.
# ---------------------------------------------------------------------------
def _coeffs_from_stats(s, gamma_w, beta_w, *, n_true, p, c_pad, num_groups, cg, eps):
    cw = s.shape[1]                                              # = p * c_pad
    lane = jax.lax.broadcasted_iota(jnp.int32, (num_groups, cw), 1)
    grp = jax.lax.broadcasted_iota(jnp.int32, (num_groups, cw), 0)
    # channel of each wide lane; when p > 1, c_pad is a power-of-two divisor of 128.
    ch = (lane % c_pad) if p > 1 else lane
    lo = grp * cg
    # mask[g, l] = 1 iff lane l holds a real channel of group g (pad lanes excluded
    # automatically since the last group's upper bound is the real channel count).
    mask = jnp.logical_and(ch >= lo, ch < lo + cg).astype(jnp.float32)   # (G, cw)

    gs = jnp.sum(s[:, None, :] * mask[None, :, :], axis=2)      # (2, G) group sums
    denom = float(n_true * cg)
    mean_g = gs[0:1, :] / denom
    var_g = jnp.maximum(gs[1:2, :] / denom - mean_g * mean_g, 0.0)   # clamp >= 0
    inv_g = jax.lax.rsqrt(var_g + eps)
    coeff_g = jnp.concatenate([inv_g, -mean_g * inv_g], axis=0)  # (2, G)
    coeff_w = jnp.sum(coeff_g[:, :, None] * mask[None, :, :], axis=1)   # (2, cw)

    scale = coeff_w[0:1, :] * gamma_w                            # pad lanes: gamma=0
    shift = coeff_w[1:2, :] * gamma_w + beta_w
    return scale, shift


# ---------------------------------------------------------------------------
# Pass 1: per-lane sum / sum-of-squares, accumulated across vertex tiles into
# a per-shard resident 8-row f32 output block (rows 0/1 used).
# ---------------------------------------------------------------------------
def _stats_kernel(x_ref, s_ref):
    @pl.when(pl.program_id(1) == 0)
    def _():
        s_ref[...] = jnp.zeros_like(s_ref)

    x = x_ref[...].astype(jnp.float32)                           # (TNW, CW)
    s_ref[0:1, :] += jnp.sum(x, axis=0, keepdims=True)
    s_ref[1:2, :] += jnp.sum(x * x, axis=0, keepdims=True)


# ---------------------------------------------------------------------------
# Pass 2: combine shard partials, build scale/shift in-kernel, y = x*scale+shift.
# Coefficient math is O(G*CW) per step -> negligible vs. the tile FMA/DMA.
# ---------------------------------------------------------------------------
def _normalize_kernel(x_ref, s_ref, g_ref, b_ref, o_ref, *,
                      shards, n_true, p, c_pad, num_groups, cg, eps):
    s_all = s_ref[...]                                           # (shards*8, CW) f32
    s = s_all[0:2, :]
    for k in range(1, shards):
        s = s + s_all[8 * k:8 * k + 2, :]
    scale, shift = _coeffs_from_stats(
        s, g_ref[...].astype(jnp.float32), b_ref[...].astype(jnp.float32),
        n_true=n_true, p=p, c_pad=c_pad, num_groups=num_groups, cg=cg, eps=eps)
    x = x_ref[...].astype(jnp.float32)
    o_ref[...] = (x * scale + shift).astype(o_ref.dtype)


# ---------------------------------------------------------------------------
# Small/medium-problem path: one block, fused stats + normalize (2x HBM traffic).
# ---------------------------------------------------------------------------
def _fused_kernel(x_ref, g_ref, b_ref, o_ref, *,
                  n_true, p, c_pad, num_groups, cg, eps):
    x = x_ref[...].astype(jnp.float32)                           # (NW, CW)
    s1 = jnp.sum(x, axis=0, keepdims=True)
    s2 = jnp.sum(x * x, axis=0, keepdims=True)
    s = jnp.concatenate([s1, s2], axis=0)                        # (2, CW), once per call
    scale, shift = _coeffs_from_stats(
        s, g_ref[...].astype(jnp.float32), b_ref[...].astype(jnp.float32),
        n_true=n_true, p=p, c_pad=c_pad, num_groups=num_groups, cg=cg, eps=eps)
    o_ref[...] = (x * scale + shift).astype(o_ref.dtype)


# ---------------------------------------------------------------------------
# Wrapper
# ---------------------------------------------------------------------------
@functools.partial(
    jax.jit,
    static_argnames=("num_groups", "eps", "force_two_pass", "tile_rows"),
)
def group_norm_lattice(lv, gamma, beta, num_groups, eps=1e-5,
                       force_two_pass=False, tile_rows=None):
    """GroupNorm over lattice values lv: (N, C) -> (N, C), per-channel affine."""
    n, c = lv.shape
    assert c % num_groups == 0, "val_dim must be divisible by num_groups"
    cg = c // num_groups

    itemsize = jnp.dtype(lv.dtype).itemsize
    sub = {4: 8, 2: 16, 1: 32}.get(itemsize, 8)        # dtype-aware sublane rounding

    # Lane-dense layout: either pack P vertices per 128-lane wide row, or pad
    # channels up to a multiple of 128 (padded channels get gamma=beta=0).
    if c <= 128 and 128 % c == 0:
        p, c_pad = 128 // c, c
    else:
        p, c_pad = 1, _round_up(c, 128)
    cw = p * c_pad

    gamma = gamma.astype(jnp.float32).reshape(c)
    beta = beta.astype(jnp.float32).reshape(c)
    if c_pad > c:
        gamma = jnp.pad(gamma, (0, c_pad - c))
        beta = jnp.pad(beta, (0, c_pad - c))
    gamma_w = jnp.tile(gamma, p).reshape(1, cw)
    beta_w = jnp.tile(beta, p).reshape(1, cw)

    n_w_min = _cdiv(n, p)

    # ---------------- fused single-block path (2x HBM traffic) ----------------
    n_w_small = _round_up(max(n_w_min, 1), sub)
    # Budget: input + output blocks at native dtype + ~3 f32 temporaries + headroom.
    fused_bytes = n_w_small * cw * (2 * itemsize + 12)
    fused_fits = fused_bytes <= _VMEM_LIMIT_BYTES - (8 << 20)
    if fused_fits and not force_two_pass:
        n_pad = n_w_small * p
        x = jnp.pad(lv, ((0, n_pad - n), (0, c_pad - c)))
        x_w = x.reshape(n_w_small, cw)
        kernel = functools.partial(_fused_kernel, n_true=n, p=p, c_pad=c_pad,
                                   num_groups=num_groups, cg=cg, eps=eps)
        out_w = pl.pallas_call(
            kernel,
            out_shape=jax.ShapeDtypeStruct((n_w_small, cw), lv.dtype),
            in_specs=[pl.BlockSpec((n_w_small, cw), lambda: (0, 0)),
                      pl.BlockSpec((1, cw), lambda: (0, 0)),
                      pl.BlockSpec((1, cw), lambda: (0, 0))],
            out_specs=pl.BlockSpec((n_w_small, cw), lambda: (0, 0)),
            compiler_params=pltpu.CompilerParams(
                vmem_limit_bytes=_VMEM_LIMIT_BYTES),
        )(x_w, gamma_w, beta_w)
        return out_w.reshape(n_pad, c_pad)[:n, :c]

    # ---------------------------- tiled two-pass path --------------------------
    if tile_rows is not None:
        tnw = _round_up(max(int(tile_rows), sub), sub)
    else:
        tile_bytes = max(1 << 20, min(_VMEM_LIMIT_BYTES // 12, 4 << 20))
        tnw = _round_up(max(tile_bytes // (cw * itemsize), sub), sub)

    total_tiles = max(1, _cdiv(n_w_min, tnw))
    shards = _NUM_STATS_SHARDS if total_tiles >= 2 else 1
    tiles_per_shard = _cdiv(total_tiles, shards)
    total_tiles = shards * tiles_per_shard
    n_w_pad = total_tiles * tnw
    n_pad = n_w_pad * p

    # Zero padding is exact for the stats (adds 0 to both sums; true N used in
    # the denominator); padded normalize rows are sliced off at the end.
    x = jnp.pad(lv, ((0, n_pad - n), (0, c_pad - c)))
    x_w = x.reshape(n_w_pad, cw)

    # Pass 1: per-lane sum / sumsq, sharded across TensorCores on the leading
    # "parallel" axis (v7x dual TC), f32 resident accumulator per shard.
    stats_in_kwargs = {}
    if tiles_per_shard >= 3:
        # DMA-only pass: deeper input buffering keeps HBM reads back-to-back.
        stats_in_kwargs["pipeline_mode"] = pl.Buffered(3)
    stats = pl.pallas_call(
        _stats_kernel,
        out_shape=jax.ShapeDtypeStruct((shards * 8, cw), jnp.float32),
        grid=(shards, tiles_per_shard),
        in_specs=[pl.BlockSpec((tnw, cw),
                               lambda s, i: (s * tiles_per_shard + i, 0),
                               **stats_in_kwargs)],
        out_specs=pl.BlockSpec((8, cw), lambda s, i: (s, 0)),
        compiler_params=pltpu.CompilerParams(
            dimension_semantics=("parallel", "arbitrary"),
            vmem_limit_bytes=_VMEM_LIMIT_BYTES),
    )(x_w)

    # Pass 2: elementwise FMA over vertex tiles ("parallel" -> v7x dual TCs);
    # shard-partial combination and coefficient math happen in-kernel.
    kernel2 = functools.partial(_normalize_kernel, shards=shards, n_true=n, p=p,
                                c_pad=c_pad, num_groups=num_groups, cg=cg, eps=eps)
    out_w = pl.pallas_call(
        kernel2,
        out_shape=jax.ShapeDtypeStruct((n_w_pad, cw), lv.dtype),
        grid=(total_tiles,),
        in_specs=[pl.BlockSpec((tnw, cw), lambda i: (i, 0)),
                  pl.BlockSpec((shards * 8, cw), lambda i: (0, 0)),
                  pl.BlockSpec((1, cw), lambda i: (0, 0)),
                  pl.BlockSpec((1, cw), lambda i: (0, 0))],
        out_specs=pl.BlockSpec((tnw, cw), lambda i: (i, 0)),
        compiler_params=pltpu.CompilerParams(
            dimension_semantics=("parallel",),
            vmem_limit_bytes=_VMEM_LIMIT_BYTES),
    )(x_w, stats, gamma_w, beta_w)
    return out_w.reshape(n_pad, c_pad)[:n, :c]


# ---------------------------------------------------------------------------
# Module-level wrappers (mirror the PyTorch module structure)
# ---------------------------------------------------------------------------
class LatticeStub:
    """Minimal stand-in for lattice_py: holds values via set_values()."""

    def __init__(self):
        self.values = None

    def set_values(self, v):
        self.values = v


class GroupNormLatticeModule:
    def __init__(self, nr_params, affine=True):
        nr_groups = 32
        if nr_params % nr_groups != 0:
            nr_groups = int(nr_params / 2)
        assert nr_params % nr_groups == 0, "nr_params must be divisible by nr_groups"
        self.num_groups = nr_groups
        self.nr_params = nr_params
        self.eps = 1e-5
        # torch.nn.GroupNorm default (affine) init: weight=1, bias=0
        self.weight = jnp.ones((nr_params,), dtype=jnp.float32)
        self.bias = jnp.zeros((nr_params,), dtype=jnp.float32)

    def __call__(self, lattice_values, lattice_py, do_set_values=True):
        assert lattice_values.ndim == 2, \
            "lattice should be 2 dimensional, nr_vertices x val_dim"
        lv = group_norm_lattice(
            lattice_values, self.weight, self.bias,
            num_groups=self.num_groups, eps=self.eps)
        if do_set_values:
            lattice_py.set_values(lv)
        return lv, lattice_py


class Gn:
    def __init__(self):
        self.norm = None

    def __call__(self, lv, ls):
        ls.set_values(lv)
        if self.norm is None:
            self.norm = GroupNormLatticeModule(lv.shape[1])
        lv, ls = self.norm(lv, ls)
        ls.set_values(lv)
        return lv, ls


# ---------------------------------------------------------------------------
# Reference + self-test
# ---------------------------------------------------------------------------
def _reference_group_norm(lv, gamma, beta, num_groups, eps=1e-5):
    n, c = lv.shape
    cg = c // num_groups
    x = lv.astype(jnp.float32).reshape(n, num_groups, cg)
    mean = jnp.mean(x, axis=(0, 2), keepdims=True)
    var = jnp.mean((x - mean) ** 2, axis=(0, 2), keepdims=True)
    xn = (x - mean) * jax.lax.rsqrt(var + eps)
    xn = xn.reshape(n, c)
    return xn * gamma[None, :] + beta[None, :]


if __name__ == "__main__":
    key = jax.random.PRNGKey(0)
    k1, k2, k3 = jax.random.split(key, 3)

    # Case 1: small lattice, C=64 -> 32 groups of 2 channels (fused path, p=2).
    N, C = 128, 64
    lv = jax.random.normal(k1, (N, C), dtype=jnp.float32) * 2.0 + 0.5
    ls = LatticeStub()
    gn = Gn()
    lv_out, ls = gn(lv, ls)
    lv_out = jax.block_until_ready(lv_out)
    ref = _reference_group_norm(lv, gn.norm.weight, gn.norm.bias,
                                gn.norm.num_groups, gn.norm.eps)
    assert lv_out.shape == (N, C)
    assert jnp.allclose(lv_out, ref, atol=1e-4, rtol=1e-4), "fused path mismatch"
    assert ls.values is lv_out

    # Case 2: same data through the tiled two-pass pipeline
    # (2 shards x 2 tiles -> exercises sharded accumulation + parallel pass).
    lv_tiled = group_norm_lattice(lv, gn.norm.weight, gn.norm.bias,
                                  num_groups=gn.norm.num_groups, eps=gn.norm.eps,
                                  force_two_pass=True, tile_rows=16)
    lv_tiled = jax.block_until_ready(lv_tiled)
    assert jnp.allclose(lv_tiled, ref, atol=1e-4, rtol=1e-4), "tiled path mismatch"

    # Case 3: N not a multiple of the packing/tile factor -> exercises row padding.
    N2 = 100
    lv2 = jax.random.normal(k2, (N2, C), dtype=jnp.float32) * 3.0 - 1.0
    w2 = jnp.ones((C,), jnp.float32)
    b2 = jnp.zeros((C,), jnp.float32)
    ref2 = _reference_group_norm(lv2, w2, b2, 32, 1e-5)
    out2_fused = group_norm_lattice(lv2, w2, b2, num_groups=32, eps=1e-5)
    out2_tiled = group_norm_lattice(lv2, w2, b2, num_groups=32, eps=1e-5,
                                    force_two_pass=True, tile_rows=16)
    jax.block_until_ready((out2_fused, out2_tiled))
    assert jnp.allclose(out2_fused, ref2, atol=1e-4, rtol=1e-4), "padded fused mismatch"
    assert jnp.allclose(out2_tiled, ref2, atol=1e-4, rtol=1e-4), "padded tiled mismatch"

    # Case 4: C=96 (128 % C != 0) -> channel-padded lane-dense path, cg=3.
    N3, C3 = 64, 96
    lv3 = jax.random.normal(k3, (N3, C3), dtype=jnp.float32) * 1.5 + 0.25
    w3 = jnp.ones((C3,), jnp.float32)
    b3 = jnp.zeros((C3,), jnp.float32)
    ref3 = _reference_group_norm(lv3, w3, b3, 32, 1e-5)
    out3_fused = group_norm_lattice(lv3, w3, b3, num_groups=32, eps=1e-5)
    out3_tiled = group_norm_lattice(lv3, w3, b3, num_groups=32, eps=1e-5,
                                    force_two_pass=True, tile_rows=8)
    jax.block_until_ready((out3_fused, out3_tiled))
    assert jnp.allclose(out3_fused, ref3, atol=1e-4, rtol=1e-4), "C=96 fused mismatch"
    assert jnp.allclose(out3_tiled, ref3, atol=1e-4, rtol=1e-4), "C=96 tiled mismatch"

    print("KERNEL_OK")
</pallas_src>

<mosaic_0001>
module attributes {stable_mosaic.version = 11 : i64} {
  func.func @_fused_kernel(%arg0: memref<64x128xf32, #tpu.memory_space<vmem>>, %arg1: memref<1x128xf32, #tpu.memory_space<vmem>>, %arg2: memref<1x128xf32, #tpu.memory_space<vmem>>, %arg3: memref<64x128xf32, #tpu.memory_space<vmem>>) attributes {dimension_semantics = [], scalar_prefetch = 0 : i64, scratch_operands = 0 : i64, tpu.core_type = #tpu.core_type<tc>} {
    %c0 = arith.constant 0 : index
    %c0_0 = arith.constant 0 : index
    %0 = vector.load %arg0[%c0, %c0_0] : memref<64x128xf32, #tpu.memory_space<vmem>>, vector<64x128xf32>
    %cst = arith.constant dense<0.000000e+00> : vector<128xf32>
    %1 = vector.multi_reduction <add>, %0, %cst [0] : vector<64x128xf32> to vector<128xf32>
    %2 = vector.shape_cast %1 : vector<128xf32> to vector<1x128xf32>
    %3 = arith.mulf %0, %0 : vector<64x128xf32>
    %cst_1 = arith.constant dense<0.000000e+00> : vector<128xf32>
    %4 = vector.multi_reduction <add>, %3, %cst_1 [0] : vector<64x128xf32> to vector<128xf32>
    %5 = vector.shape_cast %4 : vector<128xf32> to vector<1x128xf32>
    %6 = tpu.concatenate %2, %5 in 0 : vector<1x128xf32>, vector<1x128xf32> -> vector<2x128xf32>
    %c0_2 = arith.constant 0 : index
    %c0_3 = arith.constant 0 : index
    %7 = vector.load %arg1[%c0_2, %c0_3] : memref<1x128xf32, #tpu.memory_space<vmem>>, vector<1x128xf32>
    %c0_4 = arith.constant 0 : index
    %c0_5 = arith.constant 0 : index
    %8 = vector.load %arg2[%c0_4, %c0_5] : memref<1x128xf32, #tpu.memory_space<vmem>>, vector<1x128xf32>
    %9 = tpu.iota {dimensions = array<i32: 1>} : vector<32x128xi32>
    %10 = tpu.iota {dimensions = array<i32: 0>} : vector<32x128xi32>
    %c64_i32 = arith.constant 64 : i32
    %c0_i32 = arith.constant 0 : i32
    %11 = arith.cmpi eq, %c64_i32, %c0_i32 : i32
    %c1_i32 = arith.constant 1 : i32
    %12 = arith.select %11, %c1_i32, %c64_i32 : i32
    %13 = vector.broadcast %12 : i32 to vector<32x128xi32>
    %14 = arith.remsi %9, %13 : vector<32x128xi32>
    %c0_i32_6 = arith.constant 0 : i32
    %15 = vector.broadcast %c0_i32_6 : i32 to vector<32x128xi32>
    %16 = arith.cmpi ne, %14, %15 : vector<32x128xi32>
    %c0_i32_7 = arith.constant 0 : i32
    %17 = vector.broadcast %c0_i32_7 : i32 to vector<32x128xi32>
    %18 = arith.cmpi slt, %14, %17 : vector<32x128xi32>
    %c0_i32_8 = arith.constant 0 : i32
    %19 = arith.cmpi slt, %12, %c0_i32_8 : i32
    %20 = vector.broadcast %19 : i1 to vector<32x128xi1>
    %21 = vector.broadcast %20 : vector<32x128xi1> to vector<32x128xi1>
    %22 = arith.xori %18, %21 : vector<32x128xi1>
    %23 = arith.andi %22, %16 : vector<32x128xi1>
    %24 = vector.broadcast %12 : i32 to vector<32x128xi32>
    %25 = arith.addi %14, %24 : vector<32x128xi32>
    %26 = arith.select %23, %25, %14 : vector<32x128xi1>, vector<32x128xi32>
    %c2_i32 = arith.constant 2 : i32
    %27 = vector.broadcast %c2_i32 : i32 to vector<32x128xi32>
    %28 = arith.muli %10, %27 : vector<32x128xi32>
    %29 = arith.cmpi sge, %26, %28 : vector<32x128xi32>
    %c2_i32_9 = arith.constant 2 : i32
    %30 = vector.broadcast %c2_i32_9 : i32 to vector<32x128xi32>
    %31 = arith.addi %28, %30 : vector<32x128xi32>
    %32 = arith.cmpi slt, %26, %31 : vector<32x128xi32>
    %33 = arith.andi %29, %32 : vector<32x128xi1>
    %34 = arith.extui %33 : vector<32x128xi1> to vector<32x128xi32>
    %35 = arith.sitofp %34 : vector<32x128xi32> to vector<32x128xf32>
    %36 = vector.shape_cast %6 : vector<2x128xf32> to vector<2x1x128xf32>
    %37 = vector.shape_cast %35 : vector<32x128xf32> to vector<1x32x128xf32>
    %38 = vector.broadcast %36 : vector<2x1x128xf32> to vector<2x32x128xf32>
    %39 = vector.broadcast %37 : vector<1x32x128xf32> to vector<2x32x128xf32>
    %40 = arith.mulf %38, %39 : vector<2x32x128xf32>
    %cst_10 = arith.constant dense<0.000000e+00> : vector<2x32xf32>
    %41 = vector.multi_reduction <add>, %40, %cst_10 [2] : vector<2x32x128xf32> to vector<2x32xf32>
    %42 = vector.extract_strided_slice %41 {offsets = [0, 0], sizes = [1, 32], strides = [1, 1]} : vector<2x32xf32> to vector<1x32xf32>
    %cst_11 = arith.constant 2.560000e+02 : f32
    %43 = vector.broadcast %cst_11 : f32 to vector<1x32xf32>
    %44 = arith.divf %42, %43 : vector<1x32xf32>
    %45 = vector.extract_strided_slice %41 {offsets = [1, 0], sizes = [1, 32], strides = [1, 1]} : vector<2x32xf32> to vector<1x32xf32>
    %cst_12 = arith.constant 2.560000e+02 : f32
    %46 = vector.broadcast %cst_12 : f32 to vector<1x32xf32>
    %47 = arith.divf %45, %46 : vector<1x32xf32>
    %48 = arith.mulf %44, %44 : vector<1x32xf32>
    %49 = arith.subf %47, %48 : vector<1x32xf32>
    %cst_13 = arith.constant 0.000000e+00 : f32
    %50 = vector.broadcast %cst_13 : f32 to vector<1x32xf32>
    %51 = arith.maximumf %49, %50 : vector<1x32xf32>
    %cst_14 = arith.constant 9.99999974E-6 : f32
    %52 = vector.broadcast %cst_14 : f32 to vector<1x32xf32>
    %53 = arith.addf %51, %52 : vector<1x32xf32>
    %54 = math.rsqrt %53 : vector<1x32xf32>
    %cst_15 = arith.constant 0.000000e+00 : f32
    %55 = vector.broadcast %cst_15 : f32 to vector<1x32xf32>
    %56 = arith.subf %55, %44 : vector<1x32xf32>
    %57 = arith.mulf %56, %54 : vector<1x32xf32>
    %58 = tpu.concatenate %54, %57 in 0 : vector<1x32xf32>, vector<1x32xf32> -> vector<2x32xf32>
    %59 = vector.shape_cast %58 : vector<2x32xf32> to vector<2x32x1xf32>
    %60 = vector.shape_cast %35 : vector<32x128xf32> to vector<1x32x128xf32>
    %61 = vector.broadcast %59 : vector<2x32x1xf32> to vector<2x32x128xf32>
    %62 = vector.broadcast %60 : vector<1x32x128xf32> to vector<2x32x128xf32>
    %63 = arith.mulf %61, %62 : vector<2x32x128xf32>
    %cst_16 = arith.constant dense<0.000000e+00> : vector<2x128xf32>
    %64 = vector.multi_reduction <add>, %63, %cst_16 [1] : vector<2x32x128xf32> to vector<2x128xf32>
    %65 = vector.extract_strided_slice %64 {offsets = [0, 0], sizes = [1, 128], strides = [1, 1]} : vector<2x128xf32> to vector<1x128xf32>
    %66 = arith.mulf %65, %7 : vector<1x128xf32>
    %67 = vector.extract_strided_slice %64 {offsets = [1, 0], sizes = [1, 128], strides = [1, 1]} : vector<2x128xf32> to vector<1x128xf32>
    %68 = arith.mulf %67, %7 : vector<1x128xf32>
    %69 = arith.addf %68, %8 : vector<1x128xf32>
    %70 = vector.broadcast %66 : vector<1x128xf32> to vector<64x128xf32>
    %71 = arith.mulf %0, %70 : vector<64x128xf32>
    %72 = vector.broadcast %69 : vector<1x128xf32> to vector<64x128xf32>
    %73 = arith.addf %71, %72 : vector<64x128xf32>
    %c0_17 = arith.constant 0 : index
    %c0_18 = arith.constant 0 : index
    %74 = vector.load %arg3[%c0_17, %c0_18] : memref<64x128xf32, #tpu.memory_space<vmem>>, vector<64x128xf32>
    tpu.vector_store %arg3[%c0_17, %c0_18], %73 {strides = array<i32>} : memref<64x128xf32, #tpu.memory_space<vmem>>, vector<64x128xf32>,
    return
  }
}

</mosaic_0001>

<llo_original>
// kernel: tile.14
$region0: #{tile.14}
  %s0 = inlined_call_operand.vmem [shape: f32[2,64], index: 0, kind: input, shape index: {}]
  %s1 = inlined_call_operand.vmem [shape: f32[1,128], index: 1, kind: output, shape index: {}]
  $region1: #{tile.14} parent=0
    #allocation0 [shape = 'u8[4096]{0}', space=vmem, size = 0x1000, scoped, tag = 'scoped mem for output reshape']
    #allocation1 [shape = 'u8[4096]{0}', space=vmem, size = 0x1000, scoped, tag = 'scoped mem for input reshape']
    %s3 = sshllo.u32 0, 2
    %v4 = vld [vmem:[%s0] sm:%s3]
    %5 = vst [vmem:[#allocation1] sm:%s3] %v4
    %v6 = vld [vmem:[#allocation1] sm:$0x1]
    %vm7 = vcmask 523264
    %8 = vst.msk [vmem:[#allocation0] sm:$0x1] %vm7, %v6
    %s9 = scalar_lea.vmem [#allocation1], 1
    %v10 = vld [vmem:[%s9] sm:$0x1]
    %11 = vrot.lane.b32.xlu0 %v10, 64
    %v12 = vpop.permute.xlu0 %11
    %vm13 = vcmask 1048064
    %14 = vst.msk [vmem:[#allocation0] sm:$0x1] %vm13, %v12
    %s16 = sshllo.u32 0, 1
    %v18 = vld [vmem:[#allocation0] sm:%s16]
    %s19 = sshllo.u32 0, 1
    %20 = vst [vmem:[%s1] sm:%s19] %v18

// kernel: tile.13
$region0: #{tile.13}
  #allocation0 [shape = 's32[1]{0}', space=sflag, size = 0x4, scoped, tag = 'scoped memory for tile.13']
  %s0 = inlined_call_operand.vmem [shape: f32[64], index: 0, kind: input, shape index: {}]
  %s1 = inlined_call_operand.vmem [shape: f32[2,64], index: 1, kind: output, shape index: {}]
  // Predicated region
  $region2: #{tile.13} parent=0 // pred_check
    _
  $region3: #{tile.13} parent=0 // pred_check_branch
    %3 = sbr.rel (0) target = $region5
  $region4: #{tile.13} parent=0 // pred_region
    _
  $region5: #{tile.13} parent=0 // pred_fallthru
    _
  %v4 = vld [vmem:[%s0] ss:$0 sm:$0xff]
  %5 = vst [vmem:[%s1] sm:$0x3] %v4

// kernel: group_norm_lattice.1
$region0: #{group_norm_lattice.1}
  #allocation0 [shape = 'u32[]', space=smem, size = 0x4, offset = 0x4, fixed_abs, tag = 'smem constant byte address 0x4 - core index']
  #allocation1 [shape = 'u32[144,128]{1,0:T(1,128)}', space=vmem, size = 0x12000, scoped, tag = 'internal scratch']
  %s0 = inlined_call_operand.vmem [shape: f32[64,128], index: 0, kind: input, shape index: {}]
  %s1 = inlined_call_operand.vmem [shape: f32[1,128], index: 1, kind: input, shape index: {}]
  %s2 = inlined_call_operand.vmem [shape: f32[1,128], index: 2, kind: input, shape index: {}]
  %s3 = inlined_call_operand.vmem [shape: f32[64,128], index: 3, kind: output, shape index: {}]
  %s4 = sld [smem:[#allocation0]]
  $region22: #{group_norm_lattice.1} parent=0
    _
  %s6 = ssub.s32 1, %s4
  %s7 = scalar_select 0, %s6, %s4
  // Predicated region
  $region2: #{group_norm_lattice.1} parent=0 // pred_check
    _
  $region3: #{group_norm_lattice.1} parent=0 // pred_check_branch
    %9 = sbr.rel (0) target = $region5
  $region4: #{group_norm_lattice.1} parent=0 // pred_region
    _
  $region5: #{group_norm_lattice.1} parent=0 // pred_fallthru
    _
  // Predicated region
  $region6: #{group_norm_lattice.1} parent=0 // pred_check
    _
  $region7: #{group_norm_lattice.1} parent=0 // pred_check_branch
    %11 = sbr.rel (0) target = $region9
  $region8: #{group_norm_lattice.1} parent=0 // pred_region
    _
  $region9: #{group_norm_lattice.1} parent=0 // pred_fallthru
    _
  // Predicated region
  $region10: #{group_norm_lattice.1} parent=0 // pred_check
    _
  $region11: #{group_norm_lattice.1} parent=0 // pred_check_branch
    %13 = sbr.rel (0) target = $region13
  $region12: #{group_norm_lattice.1} parent=0 // pred_region
    _
  $region13: #{group_norm_lattice.1} parent=0 // pred_fallthru
    _
  %v14 = vld [vmem:[%s0] sm:$0xff]
  %v15 = vld [vmem:[%s0 + $0x8] sm:$0xff]
  %v16 = vld [vmem:[%s0 + $0x10] sm:$0xff]
  %v17 = vld [vmem:[%s0 + $0x18] sm:$0xff]
  %v18 = vld [vmem:[%s0 + $0x20] sm:$0xff]
  %v19 = vld [vmem:[%s0 + $0x28] sm:$0xff]
  %v20 = vld [vmem:[%s0 + $0x30] sm:$0xff]
  %v21 = vld [vmem:[%s0 + $0x38] sm:$0xff]
  %v22 = vadd.f32 %v14, %v15
  %v23 = vadd.f32 %v22, %v16
  %v24 = vadd.f32 %v23, %v17
  %v25 = vadd.f32 %v24, %v18
  %v26 = vadd.f32 %v25, %v19
  %v27 = vadd.f32 %v26, %v20
  %v28 = vadd.f32 %v27, %v21
  %v29 = vrot.slane %v28, 4
  %v30 = vadd.f32 %v28, %v29
  %v31 = vrot.slane %v30, 2
  %v32 = vadd.f32 %v30, %v31
  %v33 = vrot.slane %v32, 1
  %v34 = vadd.f32 %v32, %v33
  %v35 = vmul.f32 %v14, %v14
  %v36 = vmul.f32 %v15, %v15
  %v37 = vmul.f32 %v16, %v16
  %v38 = vmul.f32 %v17, %v17
  %v39 = vmul.f32 %v18, %v18
  %v40 = vmul.f32 %v19, %v19
  %v41 = vmul.f32 %v20, %v20
  %v42 = vmul.f32 %v21, %v21
  %v43 = vadd.f32 %v35, %v36
  %v44 = vadd.f32 %v43, %v37
  %v45 = vadd.f32 %v44, %v38
  %v46 = vadd.f32 %v45, %v39
  %v47 = vadd.f32 %v46, %v40
  %v48 = vadd.f32 %v47, %v41
  %v49 = vadd.f32 %v48, %v42
  %v50 = vrot.slane %v49, 4
  %v51 = vadd.f32 %v49, %v50
  %v52 = vrot.slane %v51, 2
  %v53 = vadd.f32 %v51, %v52
  %v54 = vrot.slane %v53, 1
  %v55 = vadd.f32 %v53, %v54
  %vm56 = vcmask 1040384
  %v57 = vsel %vm56, %v34, %v55
  %v58 = vld [vmem:[%s1] sm:$0x1]
  %v59 = vld [vmem:[%s2] sm:$0x1]
  %v60 = vlaneseq
  %v61 = vand.u32 %v60, 127
  %v62 = vlaneseq
  %v63 = vshrl.u32 %v62, 7
  %v64 = vadd.s32 %v63, 8
  %v65 = vadd.s32 %v63, 16
  %v66 = vadd.s32 %v63, 24
  %vm67 = vcmp.lt.s32.totalorder %v61, 0
  %v68 = vsub.s32 0, %v61
  %v69 = vsel %vm67, %v68, %v61
  %v70 = vshrl.u32 %v69, 6
  %v71 = vand.u32 %v69, 63
  %v72 = vsub.s32 0, %v71
  %v73 = vsel %vm67, %v72, %v71
  %vm74 = vcmp.ne.s32.totalorder %v73, 0
  %vm75 = vcmp.lt.s32.totalorder %v73, 0
  %vm76 = vmand %vm75, %vm74
  %v77 = vadd.s32 %v73, 64
  %v78 = vsel %vm76, %v77, %v73
  %v79 = vmul.u32 %v63, 2
  %v80 = vmul.u32 %v64, 2
  %v81 = vmul.u32 %v65, 2
  %v82 = vmul.u32 %v66, 2
  %vm83 = vcmp.ge.s32.totalorder %v78, %v79
  %vm84 = vcmp.ge.s32.totalorder %v78, %v80
  %vm85 = vcmp.ge.s32.totalorder %v78, %v81
  %vm86 = vcmp.ge.s32.totalorder %v78, %v82
  %v87 = vadd.s32 %v79, 2
  %v88 = vadd.s32 %v80, 2
  %v89 = vadd.s32 %v81, 2
  %v90 = vadd.s32 %v82, 2
  %vm91 = vcmp.lt.s32.totalorder %v78, %v87
  %vm92 = vcmp.lt.s32.totalorder %v78, %v88
  %vm93 = vcmp.lt.s32.totalorder %v78, %v89
  %vm94 = vcmp.lt.s32.totalorder %v78, %v90
  %vm95 = vmand %vm83, %vm91
  %vm96 = vmand %vm84, %vm92
  %vm97 = vmand %vm85, %vm93
  %vm98 = vmand %vm86, %vm94
  %v99 = vsel %vm95, 1, 0
  %v100 = vsel %vm96, 1, 0
  %v101 = vsel %vm97, 1, 0
  %v102 = vsel %vm98, 1, 0
  %v103 = vcvt.s32.f32 %v99
  %v104 = vcvt.s32.f32 %v100
  %v105 = vcvt.s32.f32 %v101
  %v106 = vcvt.s32.f32 %v102
  %v109 = vunpack.c.l.s4 1966171168
  %v110 = vunpack.c.0.s8 %v109
  %v111 = vlaneseq
  %v112 = vshrl.u32 %v111, 7
  %v113 = vsub.s32 %v110, %v112
  %v114 = vrot.slane %v57, %v113
  %v115 = vcombine.high %v114, %v114
  %v117 = vunpack.c.l.s4 1966171168
  %v118 = vunpack.c.0.s8 %v117
  %v119 = vlaneseq
  %v120 = vshrl.u32 %v119, 7
  %v121 = vsub.s32 %v118, %v120
  %v122 = vrot.slane %v114, %v121
  %v124 = vunpack.c.l.s4 1966171168
  %v125 = vunpack.c.0.s8 %v124
  %v126 = vlaneseq
  %v127 = vshrl.u32 %v126, 7
  %v128 = vsub.s32 %v125, %v127
  %v129 = vrot.slane %v115, %v128
  %v130 = vlaneseq
  %v131 = vshrl.u32 %v130, 7
  %v132 = vsub.s32 0, %v131
  %v133 = vrot.slane %v122, %v132
  %v134 = vlaneseq
  %v135 = vshrl.u32 %v134, 7
  %v136 = vsub.s32 0, %v135
  %v137 = vrot.slane %v129, %v136
  %v140 = vmul.f32 %v133, %v103
  %v141 = vmul.f32 %v133, %v104
  %v142 = vmul.f32 %v133, %v105
  %v143 = vmul.f32 %v133, %v106
  %v144 = vmul.f32 %v137, %v103
  %v145 = vmul.f32 %v137, %v104
  %v146 = vmul.f32 %v137, %v105
  %v147 = vmul.f32 %v137, %v106
  %148 = vadd.xlane.f32.xlu0 %v140
  %v149 = vpop.xlane.xlu0 %148
  %150 = vadd.xlane.f32.xlu0 %v141
  %v151 = vpop.xlane.xlu0 %150
  %152 = vadd.xlane.f32.xlu0 %v142
  %v153 = vpop.xlane.xlu0 %152
  %154 = vadd.xlane.f32.xlu0 %v143
  %v155 = vpop.xlane.xlu0 %154
  %156 = vadd.xlane.f32.xlu0 %v144
  %v157 = vpop.xlane.xlu0 %156
  %158 = vadd.xlane.f32.xlu0 %v145
  %v159 = vpop.xlane.xlu0 %158
  %160 = vadd.xlane.f32.xlu0 %v146
  %v161 = vpop.xlane.xlu0 %160
  %162 = vadd.xlane.f32.xlu0 %v147
  %v163 = vpop.xlane.xlu0 %162
  %v164 = vrcp.pop 256.0
  %v165 = vmul.f32 %v149, %v164
  %v166 = vmul.f32 %v151, %v164
  %v167 = vmul.f32 %v153, %v164
  %v168 = vmul.f32 %v155, %v164
  %v169 = vmul.f32 %v157, %v164
  %v170 = vmul.f32 %v159, %v164
  %v171 = vmul.f32 %v161, %v164
  %v172 = vmul.f32 %v163, %v164
  %v173 = vmul.f32 %v165, %v165
  %v174 = vmul.f32 %v166, %v166
  %v175 = vmul.f32 %v167, %v167
  %v176 = vmul.f32 %v168, %v168
  %v177 = vsub.f32 %v169, %v173
  %v178 = vsub.f32 %v170, %v174
  %v179 = vsub.f32 %v171, %v175
  %v180 = vsub.f32 %v172, %v176
  %v181 = vmax.f32 %v177, 0.0
  %v182 = vmax.f32 %v178, 0.0
  %v183 = vmax.f32 %v179, 0.0
  %v184 = vmax.f32 %v180, 0.0
  %v185 = vadd.f32 %v181, 1e-05
  %v186 = vadd.f32 %v182, 1e-05
  %v187 = vadd.f32 %v183, 1e-05
  %v188 = vadd.f32 %v184, 1e-05
  %v189 = vrsqrt.pop %v185
  %v190 = vrsqrt.pop %v186
  %v191 = vrsqrt.pop %v187
  %v192 = vrsqrt.pop %v188
  %v193 = vsub.f32 0.0, %v165
  %v194 = vsub.f32 0.0, %v166
  %v195 = vsub.f32 0.0, %v167
  %v196 = vsub.f32 0.0, %v168
  %v197 = vmul.f32 %v193, %v189
  %v198 = vmul.f32 %v194, %v190
  %v199 = vmul.f32 %v195, %v191
  %v200 = vmul.f32 %v196, %v192
  %v205 = vlaneseq
  %v206 = vshrl.u32 %v205, 7
  %v207 = vsub.s32 %v61, %v206
  %v208 = vrot.slane %v189, %v207
  %v209 = vadd.s32 %v61, 4294967288
  %v210 = vlaneseq
  %v211 = vshrl.u32 %v210, 7
  %v212 = vsub.s32 %v209, %v211
  %v213 = vrot.slane %v190, %v212
  %vm214 = vcmask 130112
  %v215 = vsel %vm214, %v213, %v208
  %v216 = vadd.s32 %v61, 4294967280
  %v217 = vlaneseq
  %v218 = vshrl.u32 %v217, 7
  %v219 = vsub.s32 %v216, %v218
  %v220 = vrot.slane %v191, %v219
  %vm221 = vcmask 195712
  %v222 = vsel %vm221, %v220, %v215
  %v223 = vadd.s32 %v61, 4294967272
  %v224 = vlaneseq
  %v225 = vshrl.u32 %v224, 7
  %v226 = vsub.s32 %v223, %v225
  %v227 = vrot.slane %v192, %v226
  %vm228 = vcmask 261312
  %v229 = vsel %vm228, %v227, %v222
  %v235 = vlaneseq
  %v236 = vshrl.u32 %v235, 7
  %v237 = vsub.s32 %v61, %v236
  %v238 = vrot.slane %v197, %v237
  %v239 = vlaneseq
  %v240 = vshrl.u32 %v239, 7
  %v241 = vsub.s32 %v209, %v240
  %v242 = vrot.slane %v198, %v241
  %v243 = vsel %vm214, %v242, %v238
  %v244 = vlaneseq
  %v245 = vshrl.u32 %v244, 7
  %v246 = vsub.s32 %v216, %v245
  %v247 = vrot.slane %v199, %v246
  %v248 = vsel %vm221, %v247, %v243
  %v249 = vlaneseq
  %v250 = vshrl.u32 %v249, 7
  %v251 = vsub.s32 %v223, %v250
  %v252 = vrot.slane %v200, %v251
  %v253 = vsel %vm228, %v252, %v248
  %v255 = vsel %vm56, %v229, %v253
  %v256 = vlaneseq
  %v257 = vshrl.u32 %v256, 7
  %v258 = vsub.s32 0, %v257
  %v259 = vrot.slane %v255, %v258
  %261 = vbcast.lane.b32.xlu0 %v259, 256
  %v262 = vpop.permute.xlu0 %261
  %s264 = sor.u32 256, 8
  %265 = vbcast.lane.b32.xlu0 %v259, %s264
  %v266 = vpop.permute.xlu0 %265
  %s268 = sor.u32 256, 16
  %269 = vbcast.lane.b32.xlu0 %v259, %s268
  %v270 = vpop.permute.xlu0 %269
  %s272 = sor.u32 256, 24
  %273 = vbcast.lane.b32.xlu0 %v259, %s272
  %v274 = vpop.permute.xlu0 %273
  %v275 = vlaneseq
  %v276 = vshrl.u32 %v275, 7
  %v277 = vsub.s32 1, %v276
  %v278 = vrot.slane %v255, %v277
  %280 = vbcast.lane.b32.xlu0 %v278, 256
  %v281 = vpop.permute.xlu0 %280
  %s283 = sor.u32 256, 8
  %284 = vbcast.lane.b32.xlu0 %v278, %s283
  %v285 = vpop.permute.xlu0 %284
  %s287 = sor.u32 256, 16
  %288 = vbcast.lane.b32.xlu0 %v278, %s287
  %v289 = vpop.permute.xlu0 %288
  %s291 = sor.u32 256, 24
  %292 = vbcast.lane.b32.xlu0 %v278, %s291
  %v293 = vpop.permute.xlu0 %292
  %v294 = vmul.f32 %v262, %v103
  %v295 = vmul.f32 %v266, %v104
  %v296 = vmul.f32 %v270, %v105
  %v297 = vmul.f32 %v274, %v106
  %v298 = vmul.f32 %v281, %v103
  %v299 = vmul.f32 %v285, %v104
  %v300 = vmul.f32 %v289, %v105
  %v301 = vmul.f32 %v293, %v106
  %v302 = vadd.f32 %v294, %v295
  %v303 = vadd.f32 %v302, %v296
  %v304 = vadd.f32 %v303, %v297
  %v305 = vrot.slane %v304, 4
  %v306 = vadd.f32 %v304, %v305
  %v307 = vrot.slane %v306, 2
  %v308 = vadd.f32 %v306, %v307
  %v309 = vrot.slane %v308, 1
  %v310 = vadd.f32 %v308, %v309
  %v311 = vadd.f32 %v298, %v299
  %v312 = vadd.f32 %v311, %v300
  %v313 = vadd.f32 %v312, %v301
  %v314 = vrot.slane %v313, 4
  %v315 = vadd.f32 %v313, %v314
  %v316 = vrot.slane %v315, 2
  %v317 = vadd.f32 %v315, %v316
  %v318 = vrot.slane %v317, 1
  %v319 = vadd.f32 %v317, %v318
  %v320 = vmul.f32 %v310, %v58
  %v321 = vmul.f32 %v319, %v58
  %v322 = vadd.f32 %v321, %v59
  %v323 = vlaneseq
  %v324 = vshrl.u32 %v323, 7
  %v325 = vsub.s32 0, %v324
  %v326 = vrot.slane %v320, %v325
  %v327 = vmul.f32 %v14, %v326
  %v328 = vmul.f32 %v15, %v326
  %v329 = vmul.f32 %v16, %v326
  %v330 = vmul.f32 %v17, %v326
  %v331 = vmul.f32 %v18, %v326
  %v332 = vmul.f32 %v19, %v326
  %v333 = vmul.f32 %v20, %v326
  %v334 = vmul.f32 %v21, %v326
  %v335 = vlaneseq
  %v336 = vshrl.u32 %v335, 7
  %v337 = vsub.s32 0, %v336
  %v338 = vrot.slane %v322, %v337
  %v339 = vadd.f32 %v327, %v338
  %v340 = vadd.f32 %v328, %v338
  %v341 = vadd.f32 %v329, %v338
  %v342 = vadd.f32 %v330, %v338
  %v343 = vadd.f32 %v331, %v338
  %v344 = vadd.f32 %v332, %v338
  %v345 = vadd.f32 %v333, %v338
  %v346 = vadd.f32 %v334, %v338
  %347 = vst [vmem:[%s3] sm:$0xff] %v339
  %348 = vst [vmem:[%s3 + $0x8] sm:$0xff] %v340
  %349 = vst [vmem:[%s3 + $0x10] sm:$0xff] %v341
  %350 = vst [vmem:[%s3 + $0x18] sm:$0xff] %v342
  %351 = vst [vmem:[%s3 + $0x20] sm:$0xff] %v343
  %352 = vst [vmem:[%s3 + $0x28] sm:$0xff] %v344
  %353 = vst [vmem:[%s3 + $0x30] sm:$0xff] %v345
  %354 = vst [vmem:[%s3 + $0x38] sm:$0xff] %v346
  // Predicated region
  $region14: #{group_norm_lattice.1} parent=0 // pred_check
    _
  $region15: #{group_norm_lattice.1} parent=0 // pred_check_branch
    %356 = sbr.rel (0) target = $region17
  $region16: #{group_norm_lattice.1} parent=0 // pred_region
    _
  $region17: #{group_norm_lattice.1} parent=0 // pred_fallthru
    _
  // Predicated region
  $region18: #{group_norm_lattice.1} parent=0 // pred_check
    _
  $region19: #{group_norm_lattice.1} parent=0 // pred_check_branch
    %358 = sbr.rel (0) target = $region21
  $region20: #{group_norm_lattice.1} parent=0 // pred_region
    _
  $region21: #{group_norm_lattice.1} parent=0 // pred_fallthru
    _

</llo_original>
